<compile_context>
chip_gen: v7x
topology: tpu7x:2x2x1
jax: 0.10.0
libtpu: 0.0.40
codegen_flags: <defaults>
</compile_context>

<pallas_src>
import functools

import jax
import jax.numpy as jnp
from jax import lax
from jax.experimental import pallas as pl
from jax.experimental.pallas import tpu as pltpu

N_IN = 18
N_HID = 256
N_OUT = 12
N_OUT_PAD = 128  # lane-dense padded output width


def _round_up(n, m):
    return ((n + m - 1) // m) * m


def _bc_kernel(x_ref, w1_ref, b1_ref, w2_ref, b2_ref, w3_ref, b3_ref,
               w4_ref, b4_ref, w5_ref, b5_ref, o_ref):
    """Full forward pass of the BehaviorCloning MLP on one (TB, 18) batch tile."""
    # In-kernel f32 -> bf16 cast: free VPU work hidden under the MXU, avoids a separate
    # wrapper-side XLA pass that re-materializes x in HBM.
    x = x_ref[...].astype(jnp.bfloat16)

    # Linear(18, 256) + ReLU
    h = jnp.dot(x, w1_ref[...], preferred_element_type=jnp.float32) + b1_ref[...]
    h = jnp.maximum(h, 0.0).astype(jnp.bfloat16)

    # Linear(256, 256) + Dropout(0.1) + ReLU
    # TODO(synk): training-mode dropout (stochastic masking) not implemented; eval semantics used.
    h = jnp.dot(h, w2_ref[...], preferred_element_type=jnp.float32) + b2_ref[...]
    h = jnp.maximum(h, 0.0).astype(jnp.bfloat16)

    # Linear(256, 256) + Dropout(0.1) + ReLU
    h = jnp.dot(h, w3_ref[...], preferred_element_type=jnp.float32) + b3_ref[...]
    h = jnp.maximum(h, 0.0).astype(jnp.bfloat16)

    # Linear(256, 256) + Dropout(0.1) + ReLU
    h = jnp.dot(h, w4_ref[...], preferred_element_type=jnp.float32) + b4_ref[...]
    h = jnp.maximum(h, 0.0).astype(jnp.bfloat16)

    # Linear(256, 12 -> 128 padded) + Softmax(dim=1) over the 12 real columns.
    # Padded weight/bias entries are zero; padded lanes are masked out below.
    logits = jnp.dot(h, w5_ref[...], preferred_element_type=jnp.float32) + b5_ref[...]
    col = lax.broadcasted_iota(jnp.int32, logits.shape, 1)
    valid = col < N_OUT
    logits = jnp.where(valid, logits, jnp.float32(-1e30))  # finite sentinel, no inf/NaN risk
    m = jnp.max(logits, axis=-1, keepdims=True)
    e = jnp.where(valid, jnp.exp(logits - m), jnp.float32(0.0))
    denom = jnp.sum(e, axis=-1, keepdims=True)
    # Exact divide (negligible cost here): rows sum to 1 within f32 rounding.
    o_ref[...] = e / denom


@functools.partial(jax.jit, static_argnames=("block_b",))
def behavior_cloning_forward(x, prepped, *, block_b=1024):
    """x: (B, 18). prepped: output of prepare_params(). Returns (B, 12) softmax probs (f32)."""
    B = x.shape[0]

    # Batch tile: 16-aligned (bf16 sublane packing), large by default to amortize the ~0.35us
    # per-grid-step overhead, clamped to the padded batch.
    tb = min(block_b, _round_up(B, 16))
    if B >= 512:
        # Shape the grid to >=2 tiles so v7x can spread batch tiles over both TensorCores;
        # the extra grid step is noise on single-TC v5e/v6e.
        tb = min(tb, _round_up(-(-B // 2), 16))
    tb = _round_up(tb, 16)
    b_pad = _round_up(B, tb)

    x32 = x.astype(jnp.float32)
    if b_pad != B:  # pad only when needed
        x32 = jnp.pad(x32, ((0, b_pad - B), (0, 0)))

    weight_args = (
        prepped["w1"], prepped["b1"],
        prepped["w2"], prepped["b2"],
        prepped["w3"], prepped["b3"],
        prepped["w4"], prepped["b4"],
        prepped["w5"], prepped["b5"],
    )

    # Weights / biases: full-array blocks, constant index_map -> VMEM-resident across the grid
    # (re-DMA is skipped when the block index does not change between grid steps).
    weight_specs = [pl.BlockSpec(w.shape, lambda i: (0, 0)) for w in weight_args]

    out = pl.pallas_call(
        _bc_kernel,
        out_shape=jax.ShapeDtypeStruct((b_pad, N_OUT_PAD), jnp.float32),
        grid=(b_pad // tb,),
        in_specs=[pl.BlockSpec((tb, N_IN), lambda i: (i, 0))] + weight_specs,
        out_specs=pl.BlockSpec((tb, N_OUT_PAD), lambda i: (i, 0)),
        compiler_params=pltpu.CompilerParams(
            dimension_semantics=("parallel",),
            vmem_limit_bytes=32 * 1024 * 1024),
    )(x32, *weight_args)

    return out[:B, :N_OUT]


def init_params(key):
    """Deterministic f32 init mimicking torch.nn.Linear default U[-1/sqrt(fan_in), 1/sqrt(fan_in)]."""
    dims = [(N_IN, N_HID), (N_HID, N_HID), (N_HID, N_HID), (N_HID, N_HID), (N_HID, N_OUT)]
    params = {}
    keys = jax.random.split(key, 2 * len(dims))
    for i, (fan_in, fan_out) in enumerate(dims):
        bound = 1.0 / jnp.sqrt(jnp.float32(fan_in))
        params[f"w{i+1}"] = jax.random.uniform(
            keys[2 * i], (fan_in, fan_out), minval=-bound, maxval=bound, dtype=jnp.float32)
        params[f"b{i+1}"] = jax.random.uniform(
            keys[2 * i + 1], (1, fan_out), minval=-bound, maxval=bound, dtype=jnp.float32)
    return params


def prepare_params(params):
    """Cast weights to bf16 and zero-pad the last layer to a lane-dense (256, 128) output."""
    prepped = {}
    for i in range(1, 5):
        prepped[f"w{i}"] = params[f"w{i}"].astype(jnp.bfloat16)
        prepped[f"b{i}"] = params[f"b{i}"].astype(jnp.float32)
    w5 = jnp.zeros((N_HID, N_OUT_PAD), jnp.float32).at[:, :N_OUT].set(params["w5"])
    b5 = jnp.zeros((1, N_OUT_PAD), jnp.float32).at[:, :N_OUT].set(params["b5"])
    prepped["w5"] = w5.astype(jnp.bfloat16)
    prepped["b5"] = b5
    return prepped


def ref_forward(x, p):
    """Plain-JAX reference (f32 everywhere)."""
    h = jnp.maximum(x @ p["w1"] + p["b1"], 0.0)
    h = jnp.maximum(h @ p["w2"] + p["b2"], 0.0)
    h = jnp.maximum(h @ p["w3"] + p["b3"], 0.0)
    h = jnp.maximum(h @ p["w4"] + p["b4"], 0.0)
    logits = h @ p["w5"] + p["b5"]
    return jax.nn.softmax(logits, axis=-1)


if __name__ == "__main__":
    key = jax.random.PRNGKey(0)
    pkey, xkey1, xkey2 = jax.random.split(key, 3)
    params = init_params(pkey)
    prepped = prepare_params(params)

    # Test 1: small batch, single tile (default block_b).
    B1 = 8
    x1 = jax.random.normal(xkey1, (B1, N_IN), dtype=jnp.float32)
    out1 = jax.block_until_ready(behavior_cloning_forward(x1, prepped))
    assert out1.shape == (B1, N_OUT)
    assert bool(jnp.all(jnp.abs(jnp.sum(out1, axis=-1) - 1.0) < 1e-3))
    assert bool(jnp.all(jnp.abs(out1 - ref_forward(x1, params)) < 2e-2))

    # Test 2: non-multiple-of-tile batch with a small tile -> multi-step grid + batch padding.
    B2 = 40
    x2 = jax.random.normal(xkey2, (B2, N_IN), dtype=jnp.float32)
    out2 = jax.block_until_ready(behavior_cloning_forward(x2, prepped, block_b=16))
    assert out2.shape == (B2, N_OUT)
    assert bool(jnp.all(jnp.abs(jnp.sum(out2, axis=-1) - 1.0) < 1e-3))
    assert bool(jnp.all(jnp.abs(out2 - ref_forward(x2, params)) < 2e-2))

    print("KERNEL_OK")
</pallas_src>

<mosaic_0001>
module attributes {stable_mosaic.version = 11 : i64} {
  func.func @_bc_kernel(%arg0: i32, %arg1: memref<16x18xf32, #tpu.memory_space<vmem>>, %arg2: memref<18x256xbf16, #tpu.memory_space<vmem>>, %arg3: memref<1x256xf32, #tpu.memory_space<vmem>>, %arg4: memref<256x256xbf16, #tpu.memory_space<vmem>>, %arg5: memref<1x256xf32, #tpu.memory_space<vmem>>, %arg6: memref<256x256xbf16, #tpu.memory_space<vmem>>, %arg7: memref<1x256xf32, #tpu.memory_space<vmem>>, %arg8: memref<256x256xbf16, #tpu.memory_space<vmem>>, %arg9: memref<1x256xf32, #tpu.memory_space<vmem>>, %arg10: memref<256x128xbf16, #tpu.memory_space<vmem>>, %arg11: memref<1x128xf32, #tpu.memory_space<vmem>>, %arg12: memref<16x128xf32, #tpu.memory_space<vmem>>) attributes {dimension_semantics = [#tpu.dimension_semantics<parallel>], iteration_bounds = array<i64: 1>, scalar_prefetch = 0 : i64, scratch_operands = 0 : i64, tpu.core_type = #tpu.core_type<tc>, window_params = [{transform_indices = @transform_0, window_bounds = array<i64: 16, 18>}, {pipeline_mode = #tpu.pipeline_mode<synchronous>, transform_indices = @transform_1, window_bounds = array<i64: 18, 256>}, {pipeline_mode = #tpu.pipeline_mode<synchronous>, transform_indices = @transform_2, window_bounds = array<i64: 1, 256>}, {pipeline_mode = #tpu.pipeline_mode<synchronous>, transform_indices = @transform_3, window_bounds = array<i64: 256, 256>}, {pipeline_mode = #tpu.pipeline_mode<synchronous>, transform_indices = @transform_4, window_bounds = array<i64: 1, 256>}, {pipeline_mode = #tpu.pipeline_mode<synchronous>, transform_indices = @transform_5, window_bounds = array<i64: 256, 256>}, {pipeline_mode = #tpu.pipeline_mode<synchronous>, transform_indices = @transform_6, window_bounds = array<i64: 1, 256>}, {pipeline_mode = #tpu.pipeline_mode<synchronous>, transform_indices = @transform_7, window_bounds = array<i64: 256, 256>}, {pipeline_mode = #tpu.pipeline_mode<synchronous>, transform_indices = @transform_8, window_bounds = array<i64: 1, 256>}, {pipeline_mode = #tpu.pipeline_mode<synchronous>, transform_indices = @transform_9, window_bounds = array<i64: 256, 128>}, {pipeline_mode = #tpu.pipeline_mode<synchronous>, transform_indices = @transform_10, window_bounds = array<i64: 1, 128>}, {transform_indices = @transform_11, window_bounds = array<i64: 16, 128>}]} {
    %c0 = arith.constant 0 : index
    %c0_0 = arith.constant 0 : index
    %0 = vector.load %arg1[%c0, %c0_0] : memref<16x18xf32, #tpu.memory_space<vmem>>, vector<16x18xf32>
    %1 = arith.truncf %0 : vector<16x18xf32> to vector<16x18xbf16>
    %c0_1 = arith.constant 0 : index
    %c0_2 = arith.constant 0 : index
    %2 = vector.load %arg2[%c0_1, %c0_2] : memref<18x256xbf16, #tpu.memory_space<vmem>>, vector<18x256xbf16>
    %cst = arith.constant dense<0.000000e+00> : vector<16x256xf32>
    %3 = tpu.matmul %1, %2, %cst {dimension_numbers = #tpu.dot_dimension_numbers<[1], [0], [0], [1], [0, 0, 1, 1], [], []>} : vector<16x18xbf16>, vector<18x256xbf16>, vector<16x256xf32> -> vector<16x256xf32>
    %c0_3 = arith.constant 0 : index
    %c0_4 = arith.constant 0 : index
    %4 = vector.load %arg3[%c0_3, %c0_4] : memref<1x256xf32, #tpu.memory_space<vmem>>, vector<1x256xf32>
    %5 = vector.broadcast %4 : vector<1x256xf32> to vector<16x256xf32>
    %6 = arith.addf %3, %5 : vector<16x256xf32>
    %cst_5 = arith.constant 0.000000e+00 : f32
    %7 = vector.broadcast %cst_5 : f32 to vector<16x256xf32>
    %8 = arith.maximumf %6, %7 : vector<16x256xf32>
    %9 = arith.truncf %8 : vector<16x256xf32> to vector<16x256xbf16>
    %c0_6 = arith.constant 0 : index
    %c0_7 = arith.constant 0 : index
    %10 = vector.load %arg4[%c0_6, %c0_7] : memref<256x256xbf16, #tpu.memory_space<vmem>>, vector<256x256xbf16>
    %cst_8 = arith.constant dense<0.000000e+00> : vector<16x256xf32>
    %11 = tpu.matmul %9, %10, %cst_8 {dimension_numbers = #tpu.dot_dimension_numbers<[1], [0], [0], [1], [0, 0, 1, 1], [], []>} : vector<16x256xbf16>, vector<256x256xbf16>, vector<16x256xf32> -> vector<16x256xf32>
    %c0_9 = arith.constant 0 : index
    %c0_10 = arith.constant 0 : index
    %12 = vector.load %arg5[%c0_9, %c0_10] : memref<1x256xf32, #tpu.memory_space<vmem>>, vector<1x256xf32>
    %13 = vector.broadcast %12 : vector<1x256xf32> to vector<16x256xf32>
    %14 = arith.addf %11, %13 : vector<16x256xf32>
    %cst_11 = arith.constant 0.000000e+00 : f32
    %15 = vector.broadcast %cst_11 : f32 to vector<16x256xf32>
    %16 = arith.maximumf %14, %15 : vector<16x256xf32>
    %17 = arith.truncf %16 : vector<16x256xf32> to vector<16x256xbf16>
    %c0_12 = arith.constant 0 : index
    %c0_13 = arith.constant 0 : index
    %18 = vector.load %arg6[%c0_12, %c0_13] : memref<256x256xbf16, #tpu.memory_space<vmem>>, vector<256x256xbf16>
    %cst_14 = arith.constant dense<0.000000e+00> : vector<16x256xf32>
    %19 = tpu.matmul %17, %18, %cst_14 {dimension_numbers = #tpu.dot_dimension_numbers<[1], [0], [0], [1], [0, 0, 1, 1], [], []>} : vector<16x256xbf16>, vector<256x256xbf16>, vector<16x256xf32> -> vector<16x256xf32>
    %c0_15 = arith.constant 0 : index
    %c0_16 = arith.constant 0 : index
    %20 = vector.load %arg7[%c0_15, %c0_16] : memref<1x256xf32, #tpu.memory_space<vmem>>, vector<1x256xf32>
    %21 = vector.broadcast %20 : vector<1x256xf32> to vector<16x256xf32>
    %22 = arith.addf %19, %21 : vector<16x256xf32>
    %cst_17 = arith.constant 0.000000e+00 : f32
    %23 = vector.broadcast %cst_17 : f32 to vector<16x256xf32>
    %24 = arith.maximumf %22, %23 : vector<16x256xf32>
    %25 = arith.truncf %24 : vector<16x256xf32> to vector<16x256xbf16>
    %c0_18 = arith.constant 0 : index
    %c0_19 = arith.constant 0 : index
    %26 = vector.load %arg8[%c0_18, %c0_19] : memref<256x256xbf16, #tpu.memory_space<vmem>>, vector<256x256xbf16>
    %cst_20 = arith.constant dense<0.000000e+00> : vector<16x256xf32>
    %27 = tpu.matmul %25, %26, %cst_20 {dimension_numbers = #tpu.dot_dimension_numbers<[1], [0], [0], [1], [0, 0, 1, 1], [], []>} : vector<16x256xbf16>, vector<256x256xbf16>, vector<16x256xf32> -> vector<16x256xf32>
    %c0_21 = arith.constant 0 : index
    %c0_22 = arith.constant 0 : index
    %28 = vector.load %arg9[%c0_21, %c0_22] : memref<1x256xf32, #tpu.memory_space<vmem>>, vector<1x256xf32>
    %29 = vector.broadcast %28 : vector<1x256xf32> to vector<16x256xf32>
    %30 = arith.addf %27, %29 : vector<16x256xf32>
    %cst_23 = arith.constant 0.000000e+00 : f32
    %31 = vector.broadcast %cst_23 : f32 to vector<16x256xf32>
    %32 = arith.maximumf %30, %31 : vector<16x256xf32>
    %33 = arith.truncf %32 : vector<16x256xf32> to vector<16x256xbf16>
    %c0_24 = arith.constant 0 : index
    %c0_25 = arith.constant 0 : index
    %34 = vector.load %arg10[%c0_24, %c0_25] : memref<256x128xbf16, #tpu.memory_space<vmem>>, vector<256x128xbf16>
    %cst_26 = arith.constant dense<0.000000e+00> : vector<16x128xf32>
    %35 = tpu.matmul %33, %34, %cst_26 {dimension_numbers = #tpu.dot_dimension_numbers<[1], [0], [0], [1], [0, 0, 1, 1], [], []>} : vector<16x256xbf16>, vector<256x128xbf16>, vector<16x128xf32> -> vector<16x128xf32>
    %c0_27 = arith.constant 0 : index
    %c0_28 = arith.constant 0 : index
    %36 = vector.load %arg11[%c0_27, %c0_28] : memref<1x128xf32, #tpu.memory_space<vmem>>, vector<1x128xf32>
    %37 = vector.broadcast %36 : vector<1x128xf32> to vector<16x128xf32>
    %38 = arith.addf %35, %37 : vector<16x128xf32>
    %39 = tpu.iota {dimensions = array<i32: 1>} : vector<16x128xi32>
    %c12_i32 = arith.constant 12 : i32
    %40 = vector.broadcast %c12_i32 : i32 to vector<16x128xi32>
    %41 = arith.cmpi slt, %39, %40 : vector<16x128xi32>
    %cst_29 = arith.constant -1.000000e+30 : f32
    %42 = vector.broadcast %cst_29 : f32 to vector<16x128xf32>
    %43 = arith.select %41, %38, %42 : vector<16x128xi1>, vector<16x128xf32>
    %cst_30 = arith.constant dense<0xFF800000> : vector<16xf32>
    %44 = vector.multi_reduction <maximumf>, %43, %cst_30 [1] : vector<16x128xf32> to vector<16xf32>
    %45 = vector.shape_cast %44 : vector<16xf32> to vector<16x1xf32>
    %46 = vector.broadcast %45 : vector<16x1xf32> to vector<16x128xf32>
    %47 = arith.subf %43, %46 : vector<16x128xf32>
    %48 = math.exp %47 : vector<16x128xf32>
    %cst_31 = arith.constant 0.000000e+00 : f32
    %49 = vector.broadcast %cst_31 : f32 to vector<16x128xf32>
    %50 = arith.select %41, %48, %49 : vector<16x128xi1>, vector<16x128xf32>
    %cst_32 = arith.constant dense<0.000000e+00> : vector<16xf32>
    %51 = vector.multi_reduction <add>, %50, %cst_32 [1] : vector<16x128xf32> to vector<16xf32>
    %52 = vector.shape_cast %51 : vector<16xf32> to vector<16x1xf32>
    %53 = vector.broadcast %52 : vector<16x1xf32> to vector<16x128xf32>
    %54 = arith.divf %50, %53 : vector<16x128xf32>
    %c0_33 = arith.constant 0 : index
    %c0_34 = arith.constant 0 : index
    %55 = vector.load %arg12[%c0_33, %c0_34] : memref<16x128xf32, #tpu.memory_space<vmem>>, vector<16x128xf32>
    tpu.vector_store %arg12[%c0_33, %c0_34], %54 {strides = array<i32>} : memref<16x128xf32, #tpu.memory_space<vmem>>, vector<16x128xf32>,
    return
  }
  func.func @transform_0(%arg0: i32) -> (i32, i32) {
    %c0_i32 = arith.constant 0 : i32
    %c0_i32_0 = arith.constant 0 : i32
    return %arg0, %c0_i32 : i32, i32
  }
  func.func @transform_1(%arg0: i32) -> (i32, i32) {
    %c0_i32 = arith.constant 0 : i32
    %c0_i32_0 = arith.constant 0 : i32
    %c0_i32_1 = arith.constant 0 : i32
    return %c0_i32, %c0_i32_0 : i32, i32
  }
  func.func @transform_2(%arg0: i32) -> (i32, i32) {
    %c0_i32 = arith.constant 0 : i32
    %c0_i32_0 = arith.constant 0 : i32
    %c0_i32_1 = arith.constant 0 : i32
    return %c0_i32, %c0_i32_0 : i32, i32
  }
  func.func @transform_3(%arg0: i32) -> (i32, i32) {
    %c0_i32 = arith.constant 0 : i32
    %c0_i32_0 = arith.constant 0 : i32
    %c0_i32_1 = arith.constant 0 : i32
    return %c0_i32, %c0_i32_0 : i32, i32
  }
  func.func @transform_4(%arg0: i32) -> (i32, i32) {
    %c0_i32 = arith.constant 0 : i32
    %c0_i32_0 = arith.constant 0 : i32
    %c0_i32_1 = arith.constant 0 : i32
    return %c0_i32, %c0_i32_0 : i32, i32
  }
  func.func @transform_5(%arg0: i32) -> (i32, i32) {
    %c0_i32 = arith.constant 0 : i32
    %c0_i32_0 = arith.constant 0 : i32
    %c0_i32_1 = arith.constant 0 : i32
    return %c0_i32, %c0_i32_0 : i32, i32
  }
  func.func @transform_6(%arg0: i32) -> (i32, i32) {
    %c0_i32 = arith.constant 0 : i32
    %c0_i32_0 = arith.constant 0 : i32
    %c0_i32_1 = arith.constant 0 : i32
    return %c0_i32, %c0_i32_0 : i32, i32
  }
  func.func @transform_7(%arg0: i32) -> (i32, i32) {
    %c0_i32 = arith.constant 0 : i32
    %c0_i32_0 = arith.constant 0 : i32
    %c0_i32_1 = arith.constant 0 : i32
    return %c0_i32, %c0_i32_0 : i32, i32
  }
  func.func @transform_8(%arg0: i32) -> (i32, i32) {
    %c0_i32 = arith.constant 0 : i32
    %c0_i32_0 = arith.constant 0 : i32
    %c0_i32_1 = arith.constant 0 : i32
    return %c0_i32, %c0_i32_0 : i32, i32
  }
  func.func @transform_9(%arg0: i32) -> (i32, i32) {
    %c0_i32 = arith.constant 0 : i32
    %c0_i32_0 = arith.constant 0 : i32
    %c0_i32_1 = arith.constant 0 : i32
    return %c0_i32, %c0_i32_0 : i32, i32
  }
  func.func @transform_10(%arg0: i32) -> (i32, i32) {
    %c0_i32 = arith.constant 0 : i32
    %c0_i32_0 = arith.constant 0 : i32
    %c0_i32_1 = arith.constant 0 : i32
    return %c0_i32, %c0_i32_0 : i32, i32
  }
  func.func @transform_11(%arg0: i32) -> (i32, i32) {
    %c0_i32 = arith.constant 0 : i32
    %c0_i32_0 = arith.constant 0 : i32
    return %arg0, %c0_i32 : i32, i32
  }
}

</mosaic_0001>

<llo_original>
// kernel: behavior_cloning_forward.1
$region0: #{behavior_cloning_forward.1}
  #allocation0 [shape = 'u32[]', space=smem, size = 0x4, offset = 0x4, fixed_abs, tag = 'smem constant byte address 0x4 - core index']
  #allocation1 [shape = 'u32[144,128]{1,0:T(1,128)}', space=vmem, size = 0x12000, scoped, tag = 'internal scratch']
  %s0 = inlined_call_operand.vmem [shape: f32[16,18], index: 0, kind: input, shape index: {}]
  %s1 = inlined_call_operand.vmem [shape: bf16[18,256], index: 1, kind: input, shape index: {}]
  %s2 = inlined_call_operand.vmem [shape: f32[1,256], index: 2, kind: input, shape index: {}]
  %s3 = inlined_call_operand.hbm [shape: bf16[256,256], index: 3, kind: input, shape index: {}]
  %s4 = inlined_call_operand.vmem [shape: f32[1,256], index: 4, kind: input, shape index: {}]
  %s5 = inlined_call_operand.hbm [shape: bf16[256,256], index: 5, kind: input, shape index: {}]
  %s6 = inlined_call_operand.vmem [shape: f32[1,256], index: 6, kind: input, shape index: {}]
  %s7 = inlined_call_operand.hbm [shape: bf16[256,256], index: 7, kind: input, shape index: {}]
  %s8 = inlined_call_operand.vmem [shape: f32[1,256], index: 8, kind: input, shape index: {}]
  %s9 = inlined_call_operand.hbm [shape: bf16[256,128], index: 9, kind: input, shape index: {}]
  %s10 = inlined_call_operand.vmem [shape: f32[1,128], index: 10, kind: input, shape index: {}]
  %s11 = inlined_call_operand.vmem [shape: f32[16,128], index: 11, kind: output, shape index: {}]
  %s12 = sld [smem:[#allocation0]]
  $region70: #{behavior_cloning_forward.1} parent=0
    _
  %s14 = ssub.s32 1, %s12
  %s15 = scalar_select 0, %s14, %s12
  $region1: #{behavior_cloning_forward.1} parent=0
    #allocation2 [shape = 'u8[131072]{0}', space=vmem, size = 0x20000, scoped, tag = 'input window, operand 3, single buffered']
    #allocation3 [shape = 's32[1]{0}', space=sflag, size = 0x4, scoped, tag = 'scoped memory for behavior_cloning_forward.1']
    #allocation4 [shape = 'u8[131072]{0}', space=vmem, size = 0x20000, scoped, tag = 'input window, operand 5, single buffered']
    #allocation5 [shape = 's32[1]{0}', space=sflag, size = 0x4, scoped, tag = 'scoped memory for behavior_cloning_forward.1']
    #allocation6 [shape = 'u8[131072]{0}', space=vmem, size = 0x20000, scoped, tag = 'input window, operand 7, single buffered']
    #allocation7 [shape = 'u8[65536]{0}', space=vmem, size = 0x10000, scoped, tag = 'input window, operand 9, single buffered']
    #allocation8 [shape = 's32[1]{0}', space=sflag, size = 0x4, scoped, tag = 'scoped memory for behavior_cloning_forward.1']
    %16 = vsyncpa [#allocation3], 0
    %17 = vsyncpa [#allocation5], 0
    %18 = vsyncpa [#allocation8], 0
    // Predicated region
    $region2: #{behavior_cloning_forward.1} parent=1 // pred_check
      _
    $region3: #{behavior_cloning_forward.1} parent=1 // pred_check_branch
      %20 = sbr.rel (0) target = $region5
    $region4: #{behavior_cloning_forward.1} parent=1 // pred_region
      _
    $region5: #{behavior_cloning_forward.1} parent=1 // pred_fallthru
      _
    // Predicated region
    $region6: #{behavior_cloning_forward.1} parent=1 // pred_check
      _
    $region7: #{behavior_cloning_forward.1} parent=1 // pred_check_branch
      %22 = sbr.rel (0) target = $region9
    $region8: #{behavior_cloning_forward.1} parent=1 // pred_region
      _
    $region9: #{behavior_cloning_forward.1} parent=1 // pred_fallthru
      _
    // Predicated region
    $region10: #{behavior_cloning_forward.1} parent=1 // pred_check
      _
    $region11: #{behavior_cloning_forward.1} parent=1 // pred_check_branch
      %24 = sbr.rel (0) target = $region13
    $region12: #{behavior_cloning_forward.1} parent=1 // pred_region
      _
    $region13: #{behavior_cloning_forward.1} parent=1 // pred_fallthru
      _
    // Predicated region
    $region14: #{behavior_cloning_forward.1} parent=1 // pred_check
      _
    $region15: #{behavior_cloning_forward.1} parent=1 // pred_check_branch
      %26 = sbr.rel (0) target = $region17
    $region16: #{behavior_cloning_forward.1} parent=1 // pred_region
      %s28 = ssub.s32 4096, 4096
      %29 = vsyncadd [#allocation3], %s28
      %s30 = sshll.u32 [#allocation2], 4
      %s31 = int_to_ptr.vmem [resolvable:$true] %s30
      %36 = dma.hbm_to_vmem [thread:$0]  %s3, 4096, %s31, [#allocation3], 128, 128, 8
    $region17: #{behavior_cloning_forward.1} parent=1 // pred_fallthru
      _
    // Predicated region
    $region18: #{behavior_cloning_forward.1} parent=1 // pred_check
      _
    $region19: #{behavior_cloning_forward.1} parent=1 // pred_check_branch
      %38 = sbr.rel (0) target = $region21
    $region20: #{behavior_cloning_forward.1} parent=1 // pred_region
      _
    $region21: #{behavior_cloning_forward.1} parent=1 // pred_fallthru
      _
    // Predicated region
    $region22: #{behavior_cloning_forward.1} parent=1 // pred_check
      _
    $region23: #{behavior_cloning_forward.1} parent=1 // pred_check_branch
      %40 = sbr.rel (0) target = $region25
    $region24: #{behavior_cloning_forward.1} parent=1 // pred_region
      %s42 = ssub.s32 4096, 4096
      %43 = vsyncadd [#allocation5], %s42
      %s44 = sshll.u32 [#allocation4], 4
      %s45 = int_to_ptr.vmem [resolvable:$true] %s44
      %50 = dma.hbm_to_vmem [thread:$0]  %s5, 4096, %s45, [#allocation5], 128, 128, 8
    $region25: #{behavior_cloning_forward.1} parent=1 // pred_fallthru
      _
    // Predicated region
    $region26: #{behavior_cloning_forward.1} parent=1 // pred_check
      _
    $region27: #{behavior_cloning_forward.1} parent=1 // pred_check_branch
      %52 = sbr.rel (0) target = $region29
    $region28: #{behavior_cloning_forward.1} parent=1 // pred_region
      _
    $region29: #{behavior_cloning_forward.1} parent=1 // pred_fallthru
      _
    // Predicated region
    $region30: #{behavior_cloning_forward.1} parent=1 // pred_check
      _
    $region31: #{behavior_cloning_forward.1} parent=1 // pred_check_branch
      %54 = sbr.rel (0) target = $region33
    $region32: #{behavior_cloning_forward.1} parent=1 // pred_region
      %s56 = ssub.s32 4096, 4096
      %57 = vsyncadd [#allocation5], %s56
      %s58 = sshll.u32 [#allocation6], 4
      %s59 = int_to_ptr.vmem [resolvable:$true] %s58
      %64 = dma.hbm_to_vmem [thread:$0]  %s7, 4096, %s59, [#allocation5], 128, 128, 8
    $region33: #{behavior_cloning_forward.1} parent=1 // pred_fallthru
      _
    // Predicated region
    $region34: #{behavior_cloning_forward.1} parent=1 // pred_check
      _
    $region35: #{behavior_cloning_forward.1} parent=1 // pred_check_branch
      %66 = sbr.rel (0) target = $region37
    $region36: #{behavior_cloning_forward.1} parent=1 // pred_region
      _
    $region37: #{behavior_cloning_forward.1} parent=1 // pred_fallthru
      _
    // Predicated region
    $region38: #{behavior_cloning_forward.1} parent=1 // pred_check
      _
    $region39: #{behavior_cloning_forward.1} parent=1 // pred_check_branch
      %68 = sbr.rel (0) target = $region41
    $region40: #{behavior_cloning_forward.1} parent=1 // pred_region
      %s70 = ssub.s32 2048, 2048
      %71 = vsyncadd [#allocation8], %s70
      %s72 = sshll.u32 [#allocation7], 4
      %s73 = int_to_ptr.vmem [resolvable:$true] %s72
      %78 = dma.hbm_to_vmem [thread:$0]  %s9, 2048, %s73, [#allocation8], 64, 64, 4
    $region41: #{behavior_cloning_forward.1} parent=1 // pred_fallthru
      _
    // Predicated region
    $region42: #{behavior_cloning_forward.1} parent=1 // pred_check
      _
    $region43: #{behavior_cloning_forward.1} parent=1 // pred_check_branch
      %80 = sbr.rel (0) target = $region45
    $region44: #{behavior_cloning_forward.1} parent=1 // pred_region
      _
    $region45: #{behavior_cloning_forward.1} parent=1 // pred_fallthru
      _
    // Predicated region
    $region46: #{behavior_cloning_forward.1} parent=1 // pred_check
      _
    $region47: #{behavior_cloning_forward.1} parent=1 // pred_check_branch
      %82 = sbr.rel (0) target = $region49
    $region48: #{behavior_cloning_forward.1} parent=1 // pred_region
      %83 = dma.done [#allocation3], 4096
    $region49: #{behavior_cloning_forward.1} parent=1 // pred_fallthru
      _
    // Predicated region
    $region50: #{behavior_cloning_forward.1} parent=1 // pred_check
      _
    $region51: #{behavior_cloning_forward.1} parent=1 // pred_check_branch
      %85 = sbr.rel (0) target = $region53
    $region52: #{behavior_cloning_forward.1} parent=1 // pred_region
      %86 = dma.done [#allocation5], 4096
    $region53: #{behavior_cloning_forward.1} parent=1 // pred_fallthru
      _
    // Predicated region
    $region54: #{behavior_cloning_forward.1} parent=1 // pred_check
      _
    $region55: #{behavior_cloning_forward.1} parent=1 // pred_check_branch
      %88 = sbr.rel (0) target = $region57
    $region56: #{behavior_cloning_forward.1} parent=1 // pred_region
      %89 = dma.done [#allocation5], 4096
    $region57: #{behavior_cloning_forward.1} parent=1 // pred_fallthru
      _
    // Predicated region
    $region58: #{behavior_cloning_forward.1} parent=1 // pred_check
      _
    $region59: #{behavior_cloning_forward.1} parent=1 // pred_check_branch
      %91 = sbr.rel (0) target = $region61
    $region60: #{behavior_cloning_forward.1} parent=1 // pred_region
      %92 = dma.done [#allocation8], 2048
    $region61: #{behavior_cloning_forward.1} parent=1 // pred_fallthru
      _
    %v94 = vld [vmem:[%s0] sm:$0xff]
    %v95 = vld [vmem:[%s0 + $0x8] sm:$0xff]
    %v96 = vpack.c.bf16 %v95, %v94
    %v97 = vld [vmem:[%s1] sm:$0xff]
    %v98 = vld [vmem:[%s1 + $0x8] sm:$0xff]
    %v99 = vld [vmem:[%s1 + $0x10] sm:$0x11]
    %v100 = vld [vmem:[%s2] sm:$0x3]
    %v102 = vlaneseq
    %v103 = vshrl.u32 %v102, 7
    %v104 = vsub.s32 0, %v103
    %v105 = vrot.slane %v100, %v104
    %v106 = vlaneseq
    %v107 = vshrl.u32 %v106, 7
    %v108 = vsub.s32 1, %v107
    %v109 = vrot.slane %v100, %v108
    %v115 = vunpack.c.l.b16 %v97
    %v116 = vunpack.c.h.b16 %v97
    %v117 = vunpack.c.l.b16 %v98
    %v118 = vunpack.c.h.b16 %v98
    %v119 = vunpack.c.l.b16 %v99
    %v120 = vunpack.c.h.b16 %v99
    %v121 = vpack.c.b16 %v117, %v115
    %v122 = vpack.c.b16 %v118, %v116
    %v123 = vpack.c.b16 %v119, %v119
    %v124 = vpack.c.b16 %v120, %v120
    %vm127 = vcmask 146432
    %v129 = vsel %vm127, %v96, 0
    %vm131 = vcmask 1040384
    %v133 = vsel %vm131, %v123, 0
    %v136 = vsel %vm131, %v124, 0
    %138 = vmatprep.subr.bf16.mxu0 %v122
    %139 = vmatpush1.bf16.msra.mxu0 %v121
    %140 = vmatprep.subr.bf16.mxu0 %v136
    %141 = vmatpush1.bf16.msra.mxu0 %v133
    %142 = vmatprep.subr.bf16.mxu0 0
    %143 = vmatpush1.bf16.msra.mxu0 0
    %144 = vmatprep.subr.bf16.mxu0 0
    %145 = vmatpush1.bf16.msra.mxu0 0
    %146 = vmatprep.subr.bf16.mxu0 0
    %147 = vmatpush1.bf16.msra.mxu0 0
    %148 = vmatprep.subr.bf16.mxu0 0
    %149 = vmatpush1.bf16.msra.mxu0 0
    %150 = vmatprep.subr.bf16.mxu0 0
    %151 = vmatpush1.bf16.msra.mxu0 0
    %152 = vmatprep.subr.bf16.mxu0 0
    %153 = vmatpush1.bf16.msra.mxu0 0
    %154 = vmatprep.subr.bf16.mxu0 0
    %155 = vmatpush1.bf16.msra.mxu0 0
    %156 = vmatprep.subr.bf16.mxu0 0
    %157 = vmatpush1.bf16.msra.mxu0 0
    %158 = vmatprep.subr.bf16.mxu0 0
    %159 = vmatpush1.bf16.msra.mxu0 0
    %160 = vmatprep.subr.bf16.mxu0 0
    %161 = vmatpush1.bf16.msra.mxu0 0
    %162 = vmatprep.subr.bf16.mxu0 0
    %163 = vmatpush1.bf16.msra.mxu0 0
    %164 = vmatprep.subr.bf16.mxu0 0
    %165 = vmatpush1.bf16.msra.mxu0 0
    %166 = vmatprep.subr.bf16.mxu0 0
    %167 = vmatpush1.bf16.msra.mxu0 0
    %168 = vmatprep.subr.bf16.mxu0 0
    %169 = vmatpush1.bf16.msra.mxu0 0
    %170 = vmatprep.mubr.bf16.mxu0 0
    %171 = vmatmul.mubr.bf16.gmra.mrb[0].mxu0 %v129
    %v172 = vpop.f32.mrb[0].mxu0
    %v173 = vadd.f32 %v105, %v172
    %v174 = vpop.f32.mrb[0].mxu0
    %v175 = vadd.f32 %v109, %v174
    %v176 = vpop.f32.mrb[0].mxu0
    %v177 = vadd.f32 %v105, %v176
    %v178 = vpop.f32.mrb[0].mxu0
    %v179 = vadd.f32 %v109, %v178
    %180 = vdwg.mxu0
    %v181 = vmax.f32 %v173, 0.0
    %v182 = vmax.f32 %v175, 0.0
    %v183 = vmax.f32 %v177, 0.0
    %v184 = vmax.f32 %v179, 0.0
    %v185 = vpack.c.bf16 %v183, %v181
    %v186 = vpack.c.bf16 %v184, %v182
    %v187 = vld [vmem:[#allocation2] sm:$0xff]
    %v188 = vld [vmem:[#allocation2 + $0x8] sm:$0xff]
    %v189 = vld [vmem:[#allocation2 + $0x10] sm:$0xff]
    %v190 = vld [vmem:[#allocation2 + $0x18] sm:$0xff]
    %v191 = vld [vmem:[#allocation2 + $0x20] sm:$0xff]
    %v192 = vld [vmem:[#allocation2 + $0x28] sm:$0xff]
    %v193 = vld [vmem:[#allocation2 + $0x30] sm:$0xff]
    %v194 = vld [vmem:[#allocation2 + $0x38] sm:$0xff]
    %v195 = vld [vmem:[#allocation2 + $0x40] sm:$0xff]
    %v196 = vld [vmem:[#allocation2 + $0x48] sm:$0xff]
    %v197 = vld [vmem:[#allocation2 + $0x50] sm:$0xff]
    %v198 = vld [vmem:[#allocation2 + $0x58] sm:$0xff]
    %v199 = vld [vmem:[#allocation2 + $0x60] sm:$0xff]
    %v200 = vld [vmem:[#allocation2 + $0x68] sm:$0xff]
    %v201 = vld [vmem:[#allocation2 + $0x70] sm:$0xff]
    %v202 = vld [vmem:[#allocation2 + $0x78] sm:$0xff]
    %v203 = vld [vmem:[#allocation2 + $0x80] sm:$0xff]
    %v204 = vld [vmem:[#allocation2 + $0x88] sm:$0xff]
    %v205 = vld [vmem:[#allocation2 + $0x90] sm:$0xff]
    %v206 = vld [vmem:[#allocation2 + $0x98] sm:$0xff]
    %v207 = vld [vmem:[#allocation2 + $0xa0] sm:$0xff]
    %v208 = vld [vmem:[#allocation2 + $0xa8] sm:$0xff]
    %v209 = vld [vmem:[#allocation2 + $0xb0] sm:$0xff]
    %v210 = vld [vmem:[#allocation2 + $0xb8] sm:$0xff]
    %v211 = vld [vmem:[#allocation2 + $0xc0] sm:$0xff]
    %v212 = vld [vmem:[#allocation2 + $0xc8] sm:$0xff]
    %v213 = vld [vmem:[#allocation2 + $0xd0] sm:$0xff]
    %v214 = vld [vmem:[#allocation2 + $0xd8] sm:$0xff]
    %v215 = vld [vmem:[#allocation2 + $0xe0] sm:$0xff]
    %v216 = vld [vmem:[#allocation2 + $0xe8] sm:$0xff]
    %v217 = vld [vmem:[#allocation2 + $0xf0] sm:$0xff]
    %v218 = vld [vmem:[#allocation2 + $0xf8] sm:$0xff]
    %v219 = vld [vmem:[%s4] sm:$0x3]
    %v221 = vlaneseq
    %v222 = vshrl.u32 %v221, 7
    %v223 = vsub.s32 0, %v222
    %v224 = vrot.slane %v219, %v223
    %v225 = vlaneseq
    %v226 = vshrl.u32 %v225, 7
    %v227 = vsub.s32 1, %v226
    %v228 = vrot.slane %v219, %v227
    %v263 = vunpack.c.l.b16 %v187
    %v264 = vunpack.c.h.b16 %v187
    %v265 = vunpack.c.l.b16 %v188
    %v266 = vunpack.c.h.b16 %v188
    %v267 = vunpack.c.l.b16 %v189
    %v268 = vunpack.c.h.b16 %v189
    %v269 = vunpack.c.l.b16 %v190
    %v270 = vunpack.c.h.b16 %v190
    %v271 = vunpack.c.l.b16 %v191
    %v272 = vunpack.c.h.b16 %v191
    %v273 = vunpack.c.l.b16 %v192
    %v274 = vunpack.c.h.b16 %v192
    %v275 = vunpack.c.l.b16 %v193
    %v276 = vunpack.c.h.b16 %v193
    %v277 = vunpack.c.l.b16 %v194
    %v278 = vunpack.c.h.b16 %v194
    %v279 = vunpack.c.l.b16 %v195
    %v280 = vunpack.c.h.b16 %v195
    %v281 = vunpack.c.l.b16 %v196
    %v282 = vunpack.c.h.b16 %v196
    %v283 = vunpack.c.l.b16 %v197
    %v284 = vunpack.c.h.b16 %v197
    %v285 = vunpack.c.l.b16 %v198
    %v286 = vunpack.c.h.b16 %v198
    %v287 = vunpack.c.l.b16 %v199
    %v288 = vunpack.c.h.b16 %v199
    %v289 = vunpack.c.l.b16 %v200
    %v290 = vunpack.c.h.b16 %v200
    %v291 = vunpack.c.l.b16 %v201
    %v292 = vunpack.c.h.b16 %v201
    %v293 = vunpack.c.l.b16 %v202
    %v294 = vunpack.c.h.b16 %v202
    %v295 = vunpack.c.l.b16 %v203
    %v296 = vunpack.c.h.b16 %v203
    %v297 = vunpack.c.l.b16 %v204
    %v298 = vunpack.c.h.b16 %v204
    %v299 = vunpack.c.l.b16 %v205
    %v300 = vunpack.c.h.b16 %v205
    %v301 = vunpack.c.l.b16 %v206
    %v302 = vunpack.c.h.b16 %v206
    %v303 = vunpack.c.l.b16 %v207
    %v304 = vunpack.c.h.b16 %v207
    %v305 = vunpack.c.l.b16 %v208
    %v306 = vunpack.c.h.b16 %v208
    %v307 = vunpack.c.l.b16 %v209
    %v308 = vunpack.c.h.b16 %v209
    %v309 = vunpack.c.l.b16 %v210
    %v310 = vunpack.c.h.b16 %v210
    %v311 = vunpack.c.l.b16 %v211
    %v312 = vunpack.c.h.b16 %v211
    %v313 = vunpack.c.l.b16 %v212
    %v314 = vunpack.c.h.b16 %v212
    %v315 = vunpack.c.l.b16 %v213
    %v316 = vunpack.c.h.b16 %v213
    %v317 = vunpack.c.l.b16 %v214
    %v318 = vunpack.c.h.b16 %v214
    %v319 = vunpack.c.l.b16 %v215
    %v320 = vunpack.c.h.b16 %v215
    %v321 = vunpack.c.l.b16 %v216
    %v322 = vunpack.c.h.b16 %v216
    %v323 = vunpack.c.l.b16 %v217
    %v324 = vunpack.c.h.b16 %v217
    %v325 = vunpack.c.l.b16 %v218
    %v326 = vunpack.c.h.b16 %v218
    %v327 = vpack.c.b16 %v265, %v263
    %v328 = vpack.c.b16 %v266, %v264
    %v329 = vpack.c.b16 %v269, %v267
    %v330 = vpack.c.b16 %v270, %v268
    %v331 = vpack.c.b16 %v273, %v271
    %v332 = vpack.c.b16 %v274, %v272
    %v333 = vpack.c.b16 %v277, %v275
    %v334 = vpack.c.b16 %v278, %v276
    %v335 = vpack.c.b16 %v281, %v279
    %v336 = vpack.c.b16 %v282, %v280
    %v337 = vpack.c.b16 %v285, %v283
    %v338 = vpack.c.b16 %v286, %v284
    %v339 = vpack.c.b16 %v289, %v287
    %v340 = vpack.c.b16 %v290, %v288
    %v341 = vpack.c.b16 %v293, %v291
    %v342 = vpack.c.b16 %v294, %v292
    %v343 = vpack.c.b16 %v297, %v295
    %v344 = vpack.c.b16 %v298, %v296
    %v345 = vpack.c.b16 %v301, %v299
    %v346 = vpack.c.b16 %v302, %v300
    %v347 = vpack.c.b16 %v305, %v303
    %v348 = vpack.c.b16 %v306, %v304
    %v349 = vpack.c.b16 %v309, %v307
    %v350 = vpack.c.b16 %v310, %v308
    %v351 = vpack.c.b16 %v313, %v311
    %v352 = vpack.c.b16 %v314, %v312
    %v353 = vpack.c.b16 %v317, %v315
    %v354 = vpack.c.b16 %v318, %v316
    %v355 = vpack.c.b16 %v321, %v319
    %v356 = vpack.c.b16 %v322, %v320
    %v357 = vpack.c.b16 %v325, %v323
    %v358 = vpack.c.b16 %v326, %v324
    %391 = vmatprep.subr.bf16.mxu0 %v328
    %392 = vmatpush1.bf16.msra.mxu0 %v327
    %393 = vmatprep.subr.bf16.mxu0 %v330
    %394 = vmatpush1.bf16.msra.mxu0 %v329
    %395 = vmatprep.subr.bf16.mxu0 %v332
    %396 = vmatpush1.bf16.msra.mxu0 %v331
    %397 = vmatprep.subr.bf16.mxu0 %v334
    %398 = vmatpush1.bf16.msra.mxu0 %v333
    %399 = vmatprep.subr.bf16.mxu0 %v336
    %400 = vmatpush1.bf16.msra.mxu0 %v335
    %401 = vmatprep.subr.bf16.mxu0 %v338
    %402 = vmatpush1.bf16.msra.mxu0 %v337
    %403 = vmatprep.subr.bf16.mxu0 %v340
    %404 = vmatpush1.bf16.msra.mxu0 %v339
    %405 = vmatprep.subr.bf16.mxu0 %v342
    %406 = vmatpush1.bf16.msra.mxu0 %v341
    %407 = vmatprep.subr.bf16.mxu0 %v344
    %408 = vmatpush1.bf16.msra.mxu0 %v343
    %409 = vmatprep.subr.bf16.mxu0 %v346
    %410 = vmatpush1.bf16.msra.mxu0 %v345
    %411 = vmatprep.subr.bf16.mxu0 %v348
    %412 = vmatpush1.bf16.msra.mxu0 %v347
    %413 = vmatprep.subr.bf16.mxu0 %v350
    %414 = vmatpush1.bf16.msra.mxu0 %v349
    %415 = vmatprep.subr.bf16.mxu0 %v352
    %416 = vmatpush1.bf16.msra.mxu0 %v351
    %417 = vmatprep.subr.bf16.mxu0 %v354
    %418 = vmatpush1.bf16.msra.mxu0 %v353
    %419 = vmatprep.subr.bf16.mxu0 %v356
    %420 = vmatpush1.bf16.msra.mxu0 %v355
    %421 = vmatprep.subr.bf16.mxu0 %v358
    %422 = vmatpush1.bf16.msra.mxu0 %v357
    %423 = vmatprep.mubr.bf16.mxu0 %v186
    %424 = vmatmul.mubr.bf16.gmra.mrb[0].mxu0 %v185
    %v425 = vpop.f32.mrb[0].mxu0
    %v426 = vadd.f32 %v224, %v425
    %v427 = vpop.f32.mrb[0].mxu0
    %v428 = vadd.f32 %v228, %v427
    %v429 = vpop.f32.mrb[0].mxu0
    %v430 = vadd.f32 %v224, %v429
    %v431 = vpop.f32.mrb[0].mxu0
    %v432 = vadd.f32 %v228, %v431
    %433 = vdwg.mxu0
    %v434 = vmax.f32 %v426, 0.0
    %v435 = vmax.f32 %v428, 0.0
    %v436 = vmax.f32 %v430, 0.0
    %v437 = vmax.f32 %v432, 0.0
    %v438 = vpack.c.bf16 %v436, %v434
    %v439 = vpack.c.bf16 %v437, %v435
    %v440 = vld [vmem:[#allocation4] sm:$0xff]
    %v441 = vld [vmem:[#allocation4 + $0x8] sm:$0xff]
    %v442 = vld [vmem:[#allocation4 + $0x10] sm:$0xff]
    %v443 = vld [vmem:[#allocation4 + $0x18] sm:$0xff]
    %v444 = vld [vmem:[#allocation4 + $0x20] sm:$0xff]
    %v445 = vld [vmem:[#allocation4 + $0x28] sm:$0xff]
    %v446 = vld [vmem:[#allocation4 + $0x30] sm:$0xff]
    %v447 = vld [vmem:[#allocation4 + $0x38] sm:$0xff]
    %v448 = vld [vmem:[#allocation4 + $0x40] sm:$0xff]
    %v449 = vld [vmem:[#allocation4 + $0x48] sm:$0xff]
    %v450 = vld [vmem:[#allocation4 + $0x50] sm:$0xff]
    %v451 = vld [vmem:[#allocation4 + $0x58] sm:$0xff]
    %v452 = vld [vmem:[#allocation4 + $0x60] sm:$0xff]
    %v453 = vld [vmem:[#allocation4 + $0x68] sm:$0xff]
    %v454 = vld [vmem:[#allocation4 + $0x70] sm:$0xff]
    %v455 = vld [vmem:[#allocation4 + $0x78] sm:$0xff]
    %v456 = vld [vmem:[#allocation4 + $0x80] sm:$0xff]
    %v457 = vld [vmem:[#allocation4 + $0x88] sm:$0xff]
    %v458 = vld [vmem:[#allocation4 + $0x90] sm:$0xff]
    %v459 = vld [vmem:[#allocation4 + $0x98] sm:$0xff]
    %v460 = vld [vmem:[#allocation4 + $0xa0] sm:$0xff]
    %v461 = vld [vmem:[#allocation4 + $0xa8] sm:$0xff]
    %v462 = vld [vmem:[#allocation4 + $0xb0] sm:$0xff]
    %v463 = vld [vmem:[#allocation4 + $0xb8] sm:$0xff]
    %v464 = vld [vmem:[#allocation4 + $0xc0] sm:$0xff]
    %v465 = vld [vmem:[#allocation4 + $0xc8] sm:$0xff]
    %v466 = vld [vmem:[#allocation4 + $0xd0] sm:$0xff]
    %v467 = vld [vmem:[#allocation4 + $0xd8] sm:$0xff]
    %v468 = vld [vmem:[#allocation4 + $0xe0] sm:$0xff]
    %v469 = vld [vmem:[#allocation4 + $0xe8] sm:$0xff]
    %v470 = vld [vmem:[#allocation4 + $0xf0] sm:$0xff]
    %v471 = vld [vmem:[#allocation4 + $0xf8] sm:$0xff]
    %v472 = vld [vmem:[%s6] sm:$0x3]
    %v474 = vlaneseq
    %v475 = vshrl.u32 %v474, 7
    %v476 = vsub.s32 0, %v475
    %v477 = vrot.slane %v472, %v476
    %v478 = vlaneseq
    %v479 = vshrl.u32 %v478, 7
    %v480 = vsub.s32 1, %v479
    %v481 = vrot.slane %v472, %v480
    %v516 = vunpack.c.l.b16 %v440
    %v517 = vunpack.c.h.b16 %v440
    %v518 = vunpack.c.l.b16 %v441
    %v519 = vunpack.c.h.b16 %v441
    %v520 = vunpack.c.l.b16 %v442
    %v521 = vunpack.c.h.b16 %v442
    %v522 = vunpack.c.l.b16 %v443
    %v523 = vunpack.c.h.b16 %v443
    %v524 = vunpack.c.l.b16 %v444
    %v525 = vunpack.c.h.b16 %v444
    %v526 = vunpack.c.l.b16 %v445
    %v527 = vunpack.c.h.b16 %v445
    %v528 = vunpack.c.l.b16 %v446
    %v529 = vunpack.c.h.b16 %v446
    %v530 = vunpack.c.l.b16 %v447
    %v531 = vunpack.c.h.b16 %v447
    %v532 = vunpack.c.l.b16 %v448
    %v533 = vunpack.c.h.b16 %v448
    %v534 = vunpack.c.l.b16 %v449
    %v535 = vunpack.c.h.b16 %v449
    %v536 = vunpack.c.l.b16 %v450
    %v537 = vunpack.c.h.b16 %v450
    %v538 = vunpack.c.l.b16 %v451
    %v539 = vunpack.c.h.b16 %v451
    %v540 = vunpack.c.l.b16 %v452
    %v541 = vunpack.c.h.b16 %v452
    %v542 = vunpack.c.l.b16 %v453
    %v543 = vunpack.c.h.b16 %v453
    %v544 = vunpack.c.l.b16 %v454
    %v545 = vunpack.c.h.b16 %v454
    %v546 = vunpack.c.l.b16 %v455
    %v547 = vunpack.c.h.b16 %v455
    %v548 = vunpack.c.l.b16 %v456
    %v549 = vunpack.c.h.b16 %v456
    %v550 = vunpack.c.l.b16 %v457
    %v551 = vunpack.c.h.b16 %v457
    %v552 = vunpack.c.l.b16 %v458
    %v553 = vunpack.c.h.b16 %v458
    %v554 = vunpack.c.l.b16 %v459
    %v555 = vunpack.c.h.b16 %v459
    %v556 = vunpack.c.l.b16 %v460
    %v557 = vunpack.c.h.b16 %v460
    %v558 = vunpack.c.l.b16 %v461
    %v559 = vunpack.c.h.b16 %v461
    %v560 = vunpack.c.l.b16 %v462
    %v561 = vunpack.c.h.b16 %v462
    %v562 = vunpack.c.l.b16 %v463
    %v563 = vunpack.c.h.b16 %v463
    %v564 = vunpack.c.l.b16 %v464
    %v565 = vunpack.c.h.b16 %v464
    %v566 = vunpack.c.l.b16 %v465
    %v567 = vunpack.c.h.b16 %v465
    %v568 = vunpack.c.l.b16 %v466
    %v569 = vunpack.c.h.b16 %v466
    %v570 = vunpack.c.l.b16 %v467
    %v571 = vunpack.c.h.b16 %v467
    %v572 = vunpack.c.l.b16 %v468
    %v573 = vunpack.c.h.b16 %v468
    %v574 = vunpack.c.l.b16 %v469
    %v575 = vunpack.c.h.b16 %v469
    %v576 = vunpack.c.l.b16 %v470
    %v577 = vunpack.c.h.b16 %v470
    %v578 = vunpack.c.l.b16 %v471
    %v579 = vunpack.c.h.b16 %v471
    %v580 = vpack.c.b16 %v518, %v516
    %v581 = vpack.c.b16 %v519, %v517
    %v582 = vpack.c.b16 %v522, %v520
    %v583 = vpack.c.b16 %v523, %v521
    %v584 = vpack.c.b16 %v526, %v524
    %v585 = vpack.c.b16 %v527, %v525
    %v586 = vpack.c.b16 %v530, %v528
    %v587 = vpack.c.b16 %v531, %v529
    %v588 = vpack.c.b16 %v534, %v532
    %v589 = vpack.c.b16 %v535, %v533
    %v590 = vpack.c.b16 %v538, %v536
    %v591 = vpack.c.b16 %v539, %v537
    %v592 = vpack.c.b16 %v542, %v540
    %v593 = vpack.c.b16 %v543, %v541
    %v594 = vpack.c.b16 %v546, %v544
    %v595 = vpack.c.b16 %v547, %v545
    %v596 = vpack.c.b16 %v550, %v548
    %v597 = vpack.c.b16 %v551, %v549
    %v598 = vpack.c.b16 %v554, %v552
    %v599 = vpack.c.b16 %v555, %v553
    %v600 = vpack.c.b16 %v558, %v556
    %v601 = vpack.c.b16 %v559, %v557
    %v602 = vpack.c.b16 %v562, %v560
    %v603 = vpack.c.b16 %v563, %v561
    %v604 = vpack.c.b16 %v566, %v564
    %v605 = vpack.c.b16 %v567, %v565
    %v606 = vpack.c.b16 %v570, %v568
    %v607 = vpack.c.b16 %v571, %v569
    %v608 = vpack.c.b16 %v574, %v572
    %v609 = vpack.c.b16 %v575, %v573
    %v610 = vpack.c.b16 %v578, %v576
    %v611 = vpack.c.b16 %v579, %v577
    %644 = vmatprep.subr.bf16.mxu0 %v581
    %645 = vmatpush1.bf16.msra.mxu0 %v580
    %646 = vmatprep.subr.bf16.mxu0 %v583
    %647 = vmatpush1.bf16.msra.mxu0 %v582
    %648 = vmatprep.subr.bf16.mxu0 %v585
    %649 = vmatpush1.bf16.msra.mxu0 %v584
    %650 = vmatprep.subr.bf16.mxu0 %v587
    %651 = vmatpush1.bf16.msra.mxu0 %v586
    %652 = vmatprep.subr.bf16.mxu0 %v589
    %653 = vmatpush1.bf16.msra.mxu0 %v588
    %654 = vmatprep.subr.bf16.mxu0 %v591
    %655 = vmatpush1.bf16.msra.mxu0 %v590
    %656 = vmatprep.subr.bf16.mxu0 %v593
    %657 = vmatpush1.bf16.msra.mxu0 %v592
    %658 = vmatprep.subr.bf16.mxu0 %v595
    %659 = vmatpush1.bf16.msra.mxu0 %v594
    %660 = vmatprep.subr.bf16.mxu0 %v597
    %661 = vmatpush1.bf16.msra.mxu0 %v596
    %662 = vmatprep.subr.bf16.mxu0 %v599
    %663 = vmatpush1.bf16.msra.mxu0 %v598
    %664 = vmatprep.subr.bf16.mxu0 %v601
    %665 = vmatpush1.bf16.msra.mxu0 %v600
    %666 = vmatprep.subr.bf16.mxu0 %v603
    %667 = vmatpush1.bf16.msra.mxu0 %v602
    %668 = vmatprep.subr.bf16.mxu0 %v605
    %669 = vmatpush1.bf16.msra.mxu0 %v604
    %670 = vmatprep.subr.bf16.mxu0 %v607
    %671 = vmatpush1.bf16.msra.mxu0 %v606
    %672 = vmatprep.subr.bf16.mxu0 %v609
    %673 = vmatpush1.bf16.msra.mxu0 %v608
    %674 = vmatprep.subr.bf16.mxu0 %v611
    %675 = vmatpush1.bf16.msra.mxu0 %v610
    %676 = vmatprep.mubr.bf16.mxu0 %v439
    %677 = vmatmul.mubr.bf16.gmra.mrb[0].mxu0 %v438
    %v678 = vpop.f32.mrb[0].mxu0
    %v679 = vadd.f32 %v477, %v678
    %v680 = vpop.f32.mrb[0].mxu0
    %v681 = vadd.f32 %v481, %v680
    %v682 = vpop.f32.mrb[0].mxu0
    %v683 = vadd.f32 %v477, %v682
    %v684 = vpop.f32.mrb[0].mxu0
    %v685 = vadd.f32 %v481, %v684
    %686 = vdwg.mxu0
    %v687 = vmax.f32 %v679, 0.0
    %v688 = vmax.f32 %v681, 0.0
    %v689 = vmax.f32 %v683, 0.0
    %v690 = vmax.f32 %v685, 0.0
    %v691 = vpack.c.bf16 %v689, %v687
    %v692 = vpack.c.bf16 %v690, %v688
    %v693 = vld [vmem:[#allocation6] sm:$0xff]
    %v694 = vld [vmem:[#allocation6 + $0x8] sm:$0xff]
    %v695 = vld [vmem:[#allocation6 + $0x10] sm:$0xff]
    %v696 = vld [vmem:[#allocation6 + $0x18] sm:$0xff]
    %v697 = vld [vmem:[#allocation6 + $0x20] sm:$0xff]
    %v698 = vld [vmem:[#allocation6 + $0x28] sm:$0xff]
    %v699 = vld [vmem:[#allocation6 + $0x30] sm:$0xff]
    %v700 = vld [vmem:[#allocation6 + $0x38] sm:$0xff]
    %v701 = vld [vmem:[#allocation6 + $0x40] sm:$0xff]
    %v702 = vld [vmem:[#allocation6 + $0x48] sm:$0xff]
    %v703 = vld [vmem:[#allocation6 + $0x50] sm:$0xff]
    %v704 = vld [vmem:[#allocation6 + $0x58] sm:$0xff]
    %v705 = vld [vmem:[#allocation6 + $0x60] sm:$0xff]
    %v706 = vld [vmem:[#allocation6 + $0x68] sm:$0xff]
    %v707 = vld [vmem:[#allocation6 + $0x70] sm:$0xff]
    %v708 = vld [vmem:[#allocation6 + $0x78] sm:$0xff]
    %v709 = vld [vmem:[#allocation6 + $0x80] sm:$0xff]
    %v710 = vld [vmem:[#allocation6 + $0x88] sm:$0xff]
    %v711 = vld [vmem:[#allocation6 + $0x90] sm:$0xff]
    %v712 = vld [vmem:[#allocation6 + $0x98] sm:$0xff]
    %v713 = vld [vmem:[#allocation6 + $0xa0] sm:$0xff]
    %v714 = vld [vmem:[#allocation6 + $0xa8] sm:$0xff]
    %v715 = vld [vmem:[#allocation6 + $0xb0] sm:$0xff]
    %v716 = vld [vmem:[#allocation6 + $0xb8] sm:$0xff]
    %v717 = vld [vmem:[#allocation6 + $0xc0] sm:$0xff]
    %v718 = vld [vmem:[#allocation6 + $0xc8] sm:$0xff]
    %v719 = vld [vmem:[#allocation6 + $0xd0] sm:$0xff]
    %v720 = vld [vmem:[#allocation6 + $0xd8] sm:$0xff]
    %v721 = vld [vmem:[#allocation6 + $0xe0] sm:$0xff]
    %v722 = vld [vmem:[#allocation6 + $0xe8] sm:$0xff]
    %v723 = vld [vmem:[#allocation6 + $0xf0] sm:$0xff]
    %v724 = vld [vmem:[#allocation6 + $0xf8] sm:$0xff]
    %v725 = vld [vmem:[%s8] sm:$0x3]
    %v727 = vlaneseq
    %v728 = vshrl.u32 %v727, 7
    %v729 = vsub.s32 0, %v728
    %v730 = vrot.slane %v725, %v729
    %v731 = vlaneseq
    %v732 = vshrl.u32 %v731, 7
    %v733 = vsub.s32 1, %v732
    %v734 = vrot.slane %v725, %v733
    %v769 = vunpack.c.l.b16 %v693
    %v770 = vunpack.c.h.b16 %v693
    %v771 = vunpack.c.l.b16 %v694
    %v772 = vunpack.c.h.b16 %v694
    %v773 = vunpack.c.l.b16 %v695
    %v774 = vunpack.c.h.b16 %v695
    %v775 = vunpack.c.l.b16 %v696
    %v776 = vunpack.c.h.b16 %v696
    %v777 = vunpack.c.l.b16 %v697
    %v778 = vunpack.c.h.b16 %v697
    %v779 = vunpack.c.l.b16 %v698
    %v780 = vunpack.c.h.b16 %v698
    %v781 = vunpack.c.l.b16 %v699
    %v782 = vunpack.c.h.b16 %v699
    %v783 = vunpack.c.l.b16 %v700
    %v784 = vunpack.c.h.b16 %v700
    %v785 = vunpack.c.l.b16 %v701
    %v786 = vunpack.c.h.b16 %v701
    %v787 = vunpack.c.l.b16 %v702
    %v788 = vunpack.c.h.b16 %v702
    %v789 = vunpack.c.l.b16 %v703
    %v790 = vunpack.c.h.b16 %v703
    %v791 = vunpack.c.l.b16 %v704
    %v792 = vunpack.c.h.b16 %v704
    %v793 = vunpack.c.l.b16 %v705
    %v794 = vunpack.c.h.b16 %v705
    %v795 = vunpack.c.l.b16 %v706
    %v796 = vunpack.c.h.b16 %v706
    %v797 = vunpack.c.l.b16 %v707
    %v798 = vunpack.c.h.b16 %v707
    %v799 = vunpack.c.l.b16 %v708
    %v800 = vunpack.c.h.b16 %v708
    %v801 = vunpack.c.l.b16 %v709
    %v802 = vunpack.c.h.b16 %v709
    %v803 = vunpack.c.l.b16 %v710
    %v804 = vunpack.c.h.b16 %v710
    %v805 = vunpack.c.l.b16 %v711
    %v806 = vunpack.c.h.b16 %v711
    %v807 = vunpack.c.l.b16 %v712
    %v808 = vunpack.c.h.b16 %v712
    %v809 = vunpack.c.l.b16 %v713
    %v810 = vunpack.c.h.b16 %v713
    %v811 = vunpack.c.l.b16 %v714
    %v812 = vunpack.c.h.b16 %v714
    %v813 = vunpack.c.l.b16 %v715
    %v814 = vunpack.c.h.b16 %v715
    %v815 = vunpack.c.l.b16 %v716
    %v816 = vunpack.c.h.b16 %v716
    %v817 = vunpack.c.l.b16 %v717
    %v818 = vunpack.c.h.b16 %v717
    %v819 = vunpack.c.l.b16 %v718
    %v820 = vunpack.c.h.b16 %v718
    %v821 = vunpack.c.l.b16 %v719
    %v822 = vunpack.c.h.b16 %v719
    %v823 = vunpack.c.l.b16 %v720
    %v824 = vunpack.c.h.b16 %v720
    %v825 = vunpack.c.l.b16 %v721
    %v826 = vunpack.c.h.b16 %v721
    %v827 = vunpack.c.l.b16 %v722
    %v828 = vunpack.c.h.b16 %v722
    %v829 = vunpack.c.l.b16 %v723
    %v830 = vunpack.c.h.b16 %v723
    %v831 = vunpack.c.l.b16 %v724
    %v832 = vunpack.c.h.b16 %v724
    %v833 = vpack.c.b16 %v771, %v769
    %v834 = vpack.c.b16 %v772, %v770
    %v835 = vpack.c.b16 %v775, %v773
    %v836 = vpack.c.b16 %v776, %v774
    %v837 = vpack.c.b16 %v779, %v777
    %v838 = vpack.c.b16 %v780, %v778
    %v839 = vpack.c.b16 %v783, %v781
    %v840 = vpack.c.b16 %v784, %v782
    %v841 = vpack.c.b16 %v787, %v785
    %v842 = vpack.c.b16 %v788, %v786
    %v843 = vpack.c.b16 %v791, %v789
    %v844 = vpack.c.b16 %v792, %v790
    %v845 = vpack.c.b16 %v795, %v793
    %v846 = vpack.c.b16 %v796, %v794
    %v847 = vpack.c.b16 %v799, %v797
    %v848 = vpack.c.b16 %v800, %v798
    %v849 = vpack.c.b16 %v803, %v801
    %v850 = vpack.c.b16 %v804, %v802
    %v851 = vpack.c.b16 %v807, %v805
    %v852 = vpack.c.b16 %v808, %v806
    %v853 = vpack.c.b16 %v811, %v809
    %v854 = vpack.c.b16 %v812, %v810
    %v855 = vpack.c.b16 %v815, %v813
    %v856 = vpack.c.b16 %v816, %v814
    %v857 = vpack.c.b16 %v819, %v817
    %v858 = vpack.c.b16 %v820, %v818
    %v859 = vpack.c.b16 %v823, %v821
    %v860 = vpack.c.b16 %v824, %v822
    %v861 = vpack.c.b16 %v827, %v825
    %v862 = vpack.c.b16 %v828, %v826
    %v863 = vpack.c.b16 %v831, %v829
    %v864 = vpack.c.b16 %v832, %v830
    %897 = vmatprep.subr.bf16.mxu0 %v834
    %898 = vmatpush1.bf16.msra.mxu0 %v833
    %899 = vmatprep.subr.bf16.mxu0 %v836
    %900 = vmatpush1.bf16.msra.mxu0 %v835
    %901 = vmatprep.subr.bf16.mxu0 %v838
    %902 = vmatpush1.bf16.msra.mxu0 %v837
    %903 = vmatprep.subr.bf16.mxu0 %v840
    %904 = vmatpush1.bf16.msra.mxu0 %v839
    %905 = vmatprep.subr.bf16.mxu0 %v842
    %906 = vmatpush1.bf16.msra.mxu0 %v841
    %907 = vmatprep.subr.bf16.mxu0 %v844
    %908 = vmatpush1.bf16.msra.mxu0 %v843
    %909 = vmatprep.subr.bf16.mxu0 %v846
    %910 = vmatpush1.bf16.msra.mxu0 %v845
    %911 = vmatprep.subr.bf16.mxu0 %v848
    %912 = vmatpush1.bf16.msra.mxu0 %v847
    %913 = vmatprep.subr.bf16.mxu0 %v850
    %914 = vmatpush1.bf16.msra.mxu0 %v849
    %915 = vmatprep.subr.bf16.mxu0 %v852
    %916 = vmatpush1.bf16.msra.mxu0 %v851
    %917 = vmatprep.subr.bf16.mxu0 %v854
    %918 = vmatpush1.bf16.msra.mxu0 %v853
    %919 = vmatprep.subr.bf16.mxu0 %v856
    %920 = vmatpush1.bf16.msra.mxu0 %v855
    %921 = vmatprep.subr.bf16.mxu0 %v858
    %922 = vmatpush1.bf16.msra.mxu0 %v857
    %923 = vmatprep.subr.bf16.mxu0 %v860
    %924 = vmatpush1.bf16.msra.mxu0 %v859
    %925 = vmatprep.subr.bf16.mxu0 %v862
    %926 = vmatpush1.bf16.msra.mxu0 %v861
    %927 = vmatprep.subr.bf16.mxu0 %v864
    %928 = vmatpush1.bf16.msra.mxu0 %v863
    %929 = vmatprep.mubr.bf16.mxu0 %v692
    %930 = vmatmul.mubr.bf16.gmra.mrb[0].mxu0 %v691
    %v931 = vpop.f32.mrb[0].mxu0
    %v932 = vadd.f32 %v730, %v931
    %v933 = vpop.f32.mrb[0].mxu0
    %v934 = vadd.f32 %v734, %v933
    %v935 = vpop.f32.mrb[0].mxu0
    %v936 = vadd.f32 %v730, %v935
    %v937 = vpop.f32.mrb[0].mxu0
    %v938 = vadd.f32 %v734, %v937
    %939 = vdwg.mxu0
    %v940 = vmax.f32 %v932, 0.0
    %v941 = vmax.f32 %v934, 0.0
    %v942 = vmax.f32 %v936, 0.0
    %v943 = vmax.f32 %v938, 0.0
    %v944 = vpack.c.bf16 %v942, %v940
    %v945 = vpack.c.bf16 %v943, %v941
    %v946 = vld [vmem:[#allocation7] sm:$0xf]
    %v947 = vld [vmem:[#allocation7 + $0x4] sm:$0xf]
    %v948 = vld [vmem:[#allocation7 + $0x8] sm:$0xf]
    %v949 = vld [vmem:[#allocation7 + $0xc] sm:$0xf]
    %v950 = vld [vmem:[#allocation7 + $0x10] sm:$0xf]
    %v951 = vld [vmem:[#allocation7 + $0x14] sm:$0xf]
    %v952 = vld [vmem:[#allocation7 + $0x18] sm:$0xf]
    %v953 = vld [vmem:[#allocation7 + $0x1c] sm:$0xf]
    %v954 = vld [vmem:[#allocation7 + $0x20] sm:$0xf]
    %v955 = vld [vmem:[#allocation7 + $0x24] sm:$0xf]
    %v956 = vld [vmem:[#allocation7 + $0x28] sm:$0xf]
    %v957 = vld [vmem:[#allocation7 + $0x2c] sm:$0xf]
    %v958 = vld [vmem:[#allocation7 + $0x30] sm:$0xf]
    %v959 = vld [vmem:[#allocation7 + $0x34] sm:$0xf]
    %v960 = vld [vmem:[#allocation7 + $0x38] sm:$0xf]
    %v961 = vld [vmem:[#allocation7 + $0x3c] sm:$0xf]
    %v962 = vld [vmem:[#allocation7 + $0x40] sm:$0xf]
    %v963 = vld [vmem:[#allocation7 + $0x44] sm:$0xf]
    %v964 = vld [vmem:[#allocation7 + $0x48] sm:$0xf]
    %v965 = vld [vmem:[#allocation7 + $0x4c] sm:$0xf]
    %v966 = vld [vmem:[#allocation7 + $0x50] sm:$0xf]
    %v967 = vld [vmem:[#allocation7 + $0x54] sm:$0xf]
    %v968 = vld [vmem:[#allocation7 + $0x58] sm:$0xf]
    %v969 = vld [vmem:[#allocation7 + $0x5c] sm:$0xf]
    %v970 = vld [vmem:[#allocation7 + $0x60] sm:$0xf]
    %v971 = vld [vmem:[#allocation7 + $0x64] sm:$0xf]
    %v972 = vld [vmem:[#allocation7 + $0x68] sm:$0xf]
    %v973 = vld [vmem:[#allocation7 + $0x6c] sm:$0xf]
    %v974 = vld [vmem:[#allocation7 + $0x70] sm:$0xf]
    %v975 = vld [vmem:[#allocation7 + $0x74] sm:$0xf]
    %v976 = vld [vmem:[#allocation7 + $0x78] sm:$0xf]
    %v977 = vld [vmem:[#allocation7 + $0x7c] sm:$0xf]
    %v978 = vld [vmem:[%s10] sm:$0x1]
    %v980 = vlaneseq
    %v981 = vshrl.u32 %v980, 7
    %v982 = vsub.s32 0, %v981
    %v983 = vrot.slane %v978, %v982
    %v1017 = vunpack.c.l.b16 %v946
    %v1018 = vunpack.c.l.b16 %v947
    %v1019 = vunpack.c.l.b16 %v948
    %v1020 = vunpack.c.l.b16 %v949
    %v1021 = vunpack.c.l.b16 %v950
    %v1022 = vunpack.c.l.b16 %v951
    %v1023 = vunpack.c.l.b16 %v952
    %v1024 = vunpack.c.l.b16 %v953
    %v1025 = vunpack.c.l.b16 %v954
    %v1026 = vunpack.c.l.b16 %v955
    %v1027 = vunpack.c.l.b16 %v956
    %v1028 = vunpack.c.l.b16 %v957
    %v1029 = vunpack.c.l.b16 %v958
    %v1030 = vunpack.c.l.b16 %v959
    %v1031 = vunpack.c.l.b16 %v960
    %v1032 = vunpack.c.l.b16 %v961
    %v1033 = vunpack.c.l.b16 %v962
    %v1034 = vunpack.c.l.b16 %v963
    %v1035 = vunpack.c.l.b16 %v964
    %v1036 = vunpack.c.l.b16 %v965
    %v1037 = vunpack.c.l.b16 %v966
    %v1038 = vunpack.c.l.b16 %v967
    %v1039 = vunpack.c.l.b16 %v968
    %v1040 = vunpack.c.l.b16 %v969
    %v1041 = vunpack.c.l.b16 %v970
    %v1042 = vunpack.c.l.b16 %v971
    %v1043 = vunpack.c.l.b16 %v972
    %v1044 = vunpack.c.l.b16 %v973
    %v1045 = vunpack.c.l.b16 %v974
    %v1046 = vunpack.c.l.b16 %v975
    %v1047 = vunpack.c.l.b16 %v976
    %v1048 = vunpack.c.l.b16 %v977
    %v1049 = vpack.c.b16 %v1018, %v1017
    %v1050 = vpack.c.b16 %v1020, %v1019
    %v1051 = vpack.c.b16 %v1022, %v1021
    %v1052 = vpack.c.b16 %v1024, %v1023
    %v1053 = vpack.c.b16 %v1026, %v1025
    %v1054 = vpack.c.b16 %v1028, %v1027
    %v1055 = vpack.c.b16 %v1030, %v1029
    %v1056 = vpack.c.b16 %v1032, %v1031
    %v1057 = vpack.c.b16 %v1034, %v1033
    %v1058 = vpack.c.b16 %v1036, %v1035
    %v1059 = vpack.c.b16 %v1038, %v1037
    %v1060 = vpack.c.b16 %v1040, %v1039
    %v1061 = vpack.c.b16 %v1042, %v1041
    %v1062 = vpack.c.b16 %v1044, %v1043
    %v1063 = vpack.c.b16 %v1046, %v1045
    %v1064 = vpack.c.b16 %v1048, %v1047
    %1081 = vmatprep.subr.bf16.mxu0 0
    %1082 = vmatpush1.bf16.msra.mxu0 %v1049
    %1083 = vmatprep.subr.bf16.mxu0 0
    %1084 = vmatpush1.bf16.msra.mxu0 %v1050
    %1085 = vmatprep.subr.bf16.mxu0 0
    %1086 = vmatpush1.bf16.msra.mxu0 %v1051
    %1087 = vmatprep.subr.bf16.mxu0 0
    %1088 = vmatpush1.bf16.msra.mxu0 %v1052
    %1089 = vmatprep.subr.bf16.mxu0 0
    %1090 = vmatpush1.bf16.msra.mxu0 %v1053
    %1091 = vmatprep.subr.bf16.mxu0 0
    %1092 = vmatpush1.bf16.msra.mxu0 %v1054
    %1093 = vmatprep.subr.bf16.mxu0 0
    %1094 = vmatpush1.bf16.msra.mxu0 %v1055
    %1095 = vmatprep.subr.bf16.mxu0 0
    %1096 = vmatpush1.bf16.msra.mxu0 %v1056
    %1097 = vmatprep.subr.bf16.mxu0 0
    %1098 = vmatpush1.bf16.msra.mxu0 %v1057
    %1099 = vmatprep.subr.bf16.mxu0 0
    %1100 = vmatpush1.bf16.msra.mxu0 %v1058
    %1101 = vmatprep.subr.bf16.mxu0 0
    %1102 = vmatpush1.bf16.msra.mxu0 %v1059
    %1103 = vmatprep.subr.bf16.mxu0 0
    %1104 = vmatpush1.bf16.msra.mxu0 %v1060
    %1105 = vmatprep.subr.bf16.mxu0 0
    %1106 = vmatpush1.bf16.msra.mxu0 %v1061
    %1107 = vmatprep.subr.bf16.mxu0 0
    %1108 = vmatpush1.bf16.msra.mxu0 %v1062
    %1109 = vmatprep.subr.bf16.mxu0 0
    %1110 = vmatpush1.bf16.msra.mxu0 %v1063
    %1111 = vmatprep.subr.bf16.mxu0 0
    %1112 = vmatpush1.bf16.msra.mxu0 %v1064
    %1113 = vmatprep.mubr.bf16.mxu0 %v945
    %1114 = vmatmul.mubr.bf16.gmra.mrb[0].mxu0 %v944
    %v1115 = vpop.f32.mrb[0].mxu0
    %v1116 = vadd.f32 %v983, %v1115
    %v1117 = vpop.f32.mrb[0].mxu0
    %v1118 = vpop.f32.mrb[0].mxu0
    %v1119 = vadd.f32 %v983, %v1118
    %v1120 = vpop.f32.mrb[0].mxu0
    %1121 = vdwg.mxu0
    %v1122 = vlaneseq
    %v1123 = vand.u32 %v1122, 127
    %vm1124 = vcmp.lt.s32.totalorder %v1123, 12
    %v1125 = vsel %vm1124, %v1116, -1e+30
    %v1126 = vsel %vm1124, %v1119, -1e+30
    %1127 = vmax.xlane.f32.xlu0 %v1125
    %v1128 = vpop.xlane.xlu0 %1127
    %1129 = vmax.xlane.f32.xlu0 %v1126
    %v1130 = vpop.xlane.xlu0 %1129
    %v1131 = vsub.f32 %v1125, %v1128
    %v1132 = vsub.f32 %v1126, %v1130
    %v1133 = vmul.f32 %v1131, 1.442695
    %v1134 = vpow.pop %v1133
    %v1135 = vmul.f32 %v1132, 1.442695
    %v1136 = vpow.pop %v1135
    %v1137 = vsel %vm1124, %v1134, 0.0
    %v1138 = vsel %vm1124, %v1136, 0.0
    %1139 = vadd.xlane.f32.xlu0 %v1137
    %v1140 = vpop.xlane.xlu0 %1139
    %1141 = vadd.xlane.f32.xlu0 %v1138
    %v1142 = vpop.xlane.xlu0 %1141
    %v1143 = vrcp.pop %v1140
    %v1144 = vmul.f32 %v1137, %v1143
    %v1145 = vrcp.pop %v1142
    %v1146 = vmul.f32 %v1138, %v1145
    %1147 = vst [vmem:[%s11] sm:$0xff] %v1144
    %1148 = vst [vmem:[%s11 + $0x8] sm:$0xff] %v1146
    // Predicated region
    $region62: #{behavior_cloning_forward.1} parent=1 // pred_check
      _
    $region63: #{behavior_cloning_forward.1} parent=1 // pred_check_branch
      %1150 = sbr.rel (0) target = $region65
    $region64: #{behavior_cloning_forward.1} parent=1 // pred_region
      _
    $region65: #{behavior_cloning_forward.1} parent=1 // pred_fallthru
      _
    // Predicated region
    $region66: #{behavior_cloning_forward.1} parent=1 // pred_check
      _
    $region67: #{behavior_cloning_forward.1} parent=1 // pred_check_branch
      %1152 = sbr.rel (0) target = $region69
    $region68: #{behavior_cloning_forward.1} parent=1 // pred_region
      _
    $region69: #{behavior_cloning_forward.1} parent=1 // pred_fallthru
      _
    %1153 = vsyncpa [#allocation3], 1
    %1154 = vsyncpa [#allocation5], 1
    %1155 = vsyncpa [#allocation8], 1

</llo_original>
